<compile_context>
chip_gen: v7x
topology: tpu7x:2x2x1
jax: 0.10.0
libtpu: 0.0.40
codegen_flags: <defaults>
</compile_context>

<pallas_src>
import functools

import jax
import jax.numpy as jnp
from jax import lax
from jax.experimental import pallas as pl
from jax.experimental.pallas import tpu as pltpu

EPS = 1e-5          # nn.InstanceNorm2d default eps
NEG_SLOPE = 0.2     # LeakyReLU negative slope


def _inorm_lrelu(x):
    # x: (rows, HW). One-pass moments, var clamped >= 0, rsqrt on the EUP.
    n = x.shape[-1]
    inv_n = 1.0 / n
    s = jnp.sum(x, axis=-1, keepdims=True)
    s2 = jnp.sum(x * x, axis=-1, keepdims=True)
    mean = s * inv_n
    var = jnp.maximum(s2 * inv_n - mean * mean, 0.0)
    y = (x - mean) * lax.rsqrt(var + EPS)
    return jnp.where(y >= 0, y, NEG_SLOPE * y)


def _sepconv_kernel(x_ref, dw_ref, pw_ref, mask_ref, out_ref, *,
                    H, W, C_in, C_out, bt, use_mxu):
    # x_ref:    (bt, C_in, HW)      packed images, lane-dense
    # dw_ref:   (bt*C_in, 9)        depthwise taps, row-matched to packed x rows
    # pw_ref:   (C_out, C_in)
    # mask_ref: (4, HW) f32         {col>=1, col<=W-2, row>=1, row<=H-2}
    # out_ref:  (bt, C_out, HW)
    HW = H * W
    R = bt * C_in

    x = x_ref[...].reshape(R, HW).astype(jnp.float32)
    dw = dw_ref[...].astype(jnp.float32)
    pw = pw_ref[...].astype(jnp.float32)

    m = mask_ref[...]
    m_cl = m[0:1]     # source col p-1 valid
    m_cr = m[1:2]     # source col p+1 valid
    m_rt = m[2:3]     # source row p-W valid (dy = -1)
    m_rb = m[3:4]     # source row p+W valid (dy = +1)

    # ---- depthwise 3x3: 4 rolls total (2 column + 2 row) ----
    # roll(x, s)[i] == x[i - s]  =>  shift=1 gives x[p-1], shift=HW-1 gives x[p+1].
    # Column masks are applied HERE, before any row roll, so wrapped columns never leak.
    h_l = pltpu.roll(x, shift=1, axis=1) * m_cl           # x[p-1], masked
    h_r = pltpu.roll(x, shift=HW - 1, axis=1) * m_cr      # x[p+1], masked

    def row_sum(ky):
        # per-channel weighted sum over kernel row ky (dx order: -1, 0, +1)
        return (dw[:, 3 * ky + 0:3 * ky + 1] * h_l
                + dw[:, 3 * ky + 1:3 * ky + 2] * x
                + dw[:, 3 * ky + 2:3 * ky + 3] * h_r)

    r_t = row_sum(0)   # dy = -1
    r_c = row_sum(1)   # dy =  0
    r_b = row_sum(2)   # dy = +1

    acc = (r_c
           + pltpu.roll(r_t, shift=W, axis=1) * m_rt          # r_t[p - W]
           + pltpu.roll(r_b, shift=HW - W, axis=1) * m_rb)    # r_b[p + W]

    # ---- InstanceNorm + LeakyReLU (per packed (image, channel) row) ----
    t = _inorm_lrelu(acc)                                     # (R, HW)

    # ---- pointwise 1x1 + InstanceNorm + LeakyReLU, per packed image ----
    if use_mxu:
        pw_bf16 = pw.astype(jnp.bfloat16)
    for b in range(bt):
        tb = t[b * C_in:(b + 1) * C_in, :]                    # (C_in, HW)
        if use_mxu:
            # bf16 operands, f32 accumulation on the MXU.
            y = jnp.dot(pw_bf16, tb.astype(jnp.bfloat16),
                        preferred_element_type=jnp.float32)
        else:
            # Truly tiny channels: C_in broadcast FMAs on the VPU.
            y = pw[:, 0:1] * tb[0:1, :]
            for ci in range(1, C_in):
                y = y + pw[:, ci:ci + 1] * tb[ci:ci + 1, :]   # (C_out,1)*(1,HW)
        out_ref[b] = _inorm_lrelu(y).astype(out_ref.dtype)    # lane-dense store


def separable_conv2d(x, dw_weight, pw_weight, *, hbm_dtype=None):
    """x: (N, C_in, H, W); dw_weight: (C_in, 3, 3); pw_weight: (C_out, C_in).

    hbm_dtype: optional narrower dtype (e.g. jnp.bfloat16) for the HBM->VMEM
    activation traffic (kernel computes in f32, output keeps x's dtype).
    """
    N, C_in, H, W = x.shape
    C_out = pw_weight.shape[0]
    HW = H * W
    out_dtype = x.dtype

    if hbm_dtype is not None:
        x = x.astype(hbm_dtype)

    # ---- sublane packing: fill >=8 sublane rows when C_in is tiny ----
    # (Trade-off: at very small N this can reduce the number of parallel grid
    #  steps available to v7x's 2 TCs; for 1-TC chips packing is strictly better.)
    if C_in >= 8 or N == 1:
        bt = 1
    else:
        target = -(-8 // C_in)  # images needed to fill 8 sublanes
        bt = max(d for d in range(1, N + 1) if N % d == 0 and d <= target)
    grid_n = N // bt

    use_mxu = (C_in >= 8) and (C_out >= 8)

    x_flat = x.reshape(N, C_in, HW)              # metadata-only reshape
    dw_flat = dw_weight.reshape(C_in, 9)         # tap index contiguous per channel
    if bt > 1:
        dw_flat = jnp.tile(dw_flat, (bt, 1))     # (bt*C_in, 9), rows match packed x

    # ---- edge masks precomputed once (no in-kernel div/mod) ----
    col = jnp.arange(HW, dtype=jnp.int32) % W
    row = jnp.arange(HW, dtype=jnp.int32) // W
    masks = jnp.stack([col >= 1, col <= W - 2, row >= 1, row <= H - 2]
                      ).astype(jnp.float32)      # (4, HW) multiplicative masks

    # NOTE: HW that is a multiple of 128 keeps stores unmasked and rolls cheap;
    # other HW is still correct (full-extent blocks) but slower.

    # ---- explicit VMEM accounting ----
    in_item = jnp.dtype(x.dtype).itemsize
    out_item = jnp.dtype(out_dtype).itemsize
    in_block = bt * C_in * HW * in_item
    out_block = bt * C_out * HW * out_item
    weight_bytes = (bt * C_in * 9 + C_out * C_in) * 4 + 4 * HW * 4
    work_bytes = (9 * bt * C_in * HW + 3 * C_out * HW) * 4   # f32 intermediates
    vmem_needed = 2 * (in_block + out_block + weight_bytes) + work_bytes
    assert vmem_needed <= (60 << 20), (
        f"per-step VMEM footprint {vmem_needed >> 20} MiB exceeds v7x budget; "
        "needs the row-tiled path (see TODO)")
    vmem_limit = int(min(64 << 20, max(vmem_needed + (4 << 20), 16 << 20)))

    kernel = functools.partial(_sepconv_kernel, H=H, W=W, C_in=C_in,
                               C_out=C_out, bt=bt, use_mxu=use_mxu)

    out = pl.pallas_call(
        kernel,
        out_shape=jax.ShapeDtypeStruct((N, C_out, HW), out_dtype),
        grid=(grid_n,),
        in_specs=[
            pl.BlockSpec((bt, C_in, HW), lambda n: (n, 0, 0)),
            pl.BlockSpec((bt * C_in, 9), lambda n: (0, 0)),
            pl.BlockSpec((C_out, C_in), lambda n: (0, 0)),
            pl.BlockSpec((4, HW), lambda n: (0, 0)),
        ],
        out_specs=pl.BlockSpec((bt, C_out, HW), lambda n: (n, 0, 0)),
        compiler_params=pltpu.CompilerParams(
            dimension_semantics=("parallel",),
            vmem_limit_bytes=vmem_limit),
    )(x_flat, dw_flat, pw_weight, masks)

    return out.reshape(N, C_out, H, W)


# ---------------- pure-JAX reference (for correctness check) ----------------
def _reference(x, dw_weight, pw_weight):
    N, C_in, H, W = x.shape
    C_out = pw_weight.shape[0]
    dw = dw_weight.reshape(C_in, 1, 3, 3)
    y = lax.conv_general_dilated(
        x, dw, window_strides=(1, 1), padding=((1, 1), (1, 1)),
        feature_group_count=C_in,
        dimension_numbers=("NCHW", "OIHW", "NCHW"))
    mean = jnp.mean(y, axis=(2, 3), keepdims=True)
    var = jnp.mean((y - mean) ** 2, axis=(2, 3), keepdims=True)
    y = (y - mean) * lax.rsqrt(var + EPS)
    y = jnp.where(y >= 0, y, NEG_SLOPE * y)
    pw = pw_weight.reshape(C_out, C_in, 1, 1)
    z = lax.conv_general_dilated(
        y, pw, window_strides=(1, 1), padding=((0, 0), (0, 0)),
        dimension_numbers=("NCHW", "OIHW", "NCHW"))
    mean = jnp.mean(z, axis=(2, 3), keepdims=True)
    var = jnp.mean((z - mean) ** 2, axis=(2, 3), keepdims=True)
    z = (z - mean) * lax.rsqrt(var + EPS)
    return jnp.where(z >= 0, z, NEG_SLOPE * z)


if __name__ == "__main__":
    key = jax.random.PRNGKey(0)
    k_x, k_dw, k_pw = jax.random.split(key, 3)

    N, C_in, C_out, H, W = 2, 4, 8, 16, 16
    x = jax.random.normal(k_x, (N, C_in, H, W), dtype=jnp.float32)
    # deterministic synthetic weights (kaiming-ish scale), bias=False
    dw_weight = jax.random.normal(k_dw, (C_in, 3, 3), dtype=jnp.float32) * 0.2
    pw_weight = jax.random.normal(k_pw, (C_out, C_in), dtype=jnp.float32) * 0.3

    out = separable_conv2d(x, dw_weight, pw_weight)
    out = jax.block_until_ready(out)

    ref = _reference(x, dw_weight, pw_weight)
    assert out.shape == (N, C_out, H, W)
    assert jnp.allclose(out, ref, atol=1e-4, rtol=1e-4), "mismatch vs reference"

    print("KERNEL_OK")
</pallas_src>

<mosaic_0001>
module attributes {stable_mosaic.version = 11 : i64} {
  func.func @_sepconv_kernel(%arg0: i32, %arg1: memref<2x4x256xf32, #tpu.memory_space<vmem>>, %arg2: memref<8x9xf32, #tpu.memory_space<vmem>>, %arg3: memref<8x4xf32, #tpu.memory_space<vmem>>, %arg4: memref<4x256xf32, #tpu.memory_space<vmem>>, %arg5: memref<2x8x256xf32, #tpu.memory_space<vmem>>) attributes {dimension_semantics = [#tpu.dimension_semantics<parallel>], iteration_bounds = array<i64: 1>, scalar_prefetch = 0 : i64, scratch_operands = 0 : i64, tpu.core_type = #tpu.core_type<tc>, window_params = [{transform_indices = @transform_0, window_bounds = array<i64: 2, 4, 256>}, {pipeline_mode = #tpu.pipeline_mode<synchronous>, transform_indices = @transform_1, window_bounds = array<i64: 8, 9>}, {pipeline_mode = #tpu.pipeline_mode<synchronous>, transform_indices = @transform_2, window_bounds = array<i64: 8, 4>}, {pipeline_mode = #tpu.pipeline_mode<synchronous>, transform_indices = @transform_3, window_bounds = array<i64: 4, 256>}, {transform_indices = @transform_4, window_bounds = array<i64: 2, 8, 256>}]} {
    %c0 = arith.constant 0 : index
    %c0_0 = arith.constant 0 : index
    %c0_1 = arith.constant 0 : index
    %0 = vector.load %arg1[%c0, %c0_0, %c0_1] : memref<2x4x256xf32, #tpu.memory_space<vmem>>, vector<2x4x256xf32>
    %1 = vector.shape_cast %0 : vector<2x4x256xf32> to vector<8x256xf32>
    %c0_2 = arith.constant 0 : index
    %c0_3 = arith.constant 0 : index
    %2 = vector.load %arg2[%c0_2, %c0_3] : memref<8x9xf32, #tpu.memory_space<vmem>>, vector<8x9xf32>
    %c0_4 = arith.constant 0 : index
    %c0_5 = arith.constant 0 : index
    %3 = vector.load %arg3[%c0_4, %c0_5] : memref<8x4xf32, #tpu.memory_space<vmem>>, vector<8x4xf32>
    %c0_6 = arith.constant 0 : index
    %c0_7 = arith.constant 0 : index
    %4 = vector.load %arg4[%c0_6, %c0_7] : memref<4x256xf32, #tpu.memory_space<vmem>>, vector<4x256xf32>
    %5 = vector.extract_strided_slice %4 {offsets = [0, 0], sizes = [1, 256], strides = [1, 1]} : vector<4x256xf32> to vector<1x256xf32>
    %6 = vector.extract_strided_slice %4 {offsets = [1, 0], sizes = [1, 256], strides = [1, 1]} : vector<4x256xf32> to vector<1x256xf32>
    %7 = vector.extract_strided_slice %4 {offsets = [2, 0], sizes = [1, 256], strides = [1, 1]} : vector<4x256xf32> to vector<1x256xf32>
    %8 = vector.extract_strided_slice %4 {offsets = [3, 0], sizes = [1, 256], strides = [1, 1]} : vector<4x256xf32> to vector<1x256xf32>
    %c1_i32 = arith.constant 1 : i32
    %9 = tpu.dynamic_rotate %1 by %c1_i32 dim 1 : vector<8x256xf32>, i32 -> vector<8x256xf32>
    %10 = vector.broadcast %5 : vector<1x256xf32> to vector<8x256xf32>
    %11 = arith.mulf %9, %10 : vector<8x256xf32>
    %c255_i32 = arith.constant 255 : i32
    %12 = tpu.dynamic_rotate %1 by %c255_i32 dim 1 : vector<8x256xf32>, i32 -> vector<8x256xf32>
    %13 = vector.broadcast %6 : vector<1x256xf32> to vector<8x256xf32>
    %14 = arith.mulf %12, %13 : vector<8x256xf32>
    %15 = vector.extract_strided_slice %2 {offsets = [0, 0], sizes = [8, 1], strides = [1, 1]} : vector<8x9xf32> to vector<8x1xf32>
    %16 = vector.broadcast %15 : vector<8x1xf32> to vector<8x256xf32>
    %17 = arith.mulf %16, %11 : vector<8x256xf32>
    %18 = vector.extract_strided_slice %2 {offsets = [0, 1], sizes = [8, 1], strides = [1, 1]} : vector<8x9xf32> to vector<8x1xf32>
    %19 = vector.broadcast %18 : vector<8x1xf32> to vector<8x256xf32>
    %20 = arith.mulf %19, %1 : vector<8x256xf32>
    %21 = arith.addf %17, %20 : vector<8x256xf32>
    %22 = vector.extract_strided_slice %2 {offsets = [0, 2], sizes = [8, 1], strides = [1, 1]} : vector<8x9xf32> to vector<8x1xf32>
    %23 = vector.broadcast %22 : vector<8x1xf32> to vector<8x256xf32>
    %24 = arith.mulf %23, %14 : vector<8x256xf32>
    %25 = arith.addf %21, %24 : vector<8x256xf32>
    %26 = vector.extract_strided_slice %2 {offsets = [0, 3], sizes = [8, 1], strides = [1, 1]} : vector<8x9xf32> to vector<8x1xf32>
    %27 = vector.broadcast %26 : vector<8x1xf32> to vector<8x256xf32>
    %28 = arith.mulf %27, %11 : vector<8x256xf32>
    %29 = vector.extract_strided_slice %2 {offsets = [0, 4], sizes = [8, 1], strides = [1, 1]} : vector<8x9xf32> to vector<8x1xf32>
    %30 = vector.broadcast %29 : vector<8x1xf32> to vector<8x256xf32>
    %31 = arith.mulf %30, %1 : vector<8x256xf32>
    %32 = arith.addf %28, %31 : vector<8x256xf32>
    %33 = vector.extract_strided_slice %2 {offsets = [0, 5], sizes = [8, 1], strides = [1, 1]} : vector<8x9xf32> to vector<8x1xf32>
    %34 = vector.broadcast %33 : vector<8x1xf32> to vector<8x256xf32>
    %35 = arith.mulf %34, %14 : vector<8x256xf32>
    %36 = arith.addf %32, %35 : vector<8x256xf32>
    %37 = vector.extract_strided_slice %2 {offsets = [0, 6], sizes = [8, 1], strides = [1, 1]} : vector<8x9xf32> to vector<8x1xf32>
    %38 = vector.broadcast %37 : vector<8x1xf32> to vector<8x256xf32>
    %39 = arith.mulf %38, %11 : vector<8x256xf32>
    %40 = vector.extract_strided_slice %2 {offsets = [0, 7], sizes = [8, 1], strides = [1, 1]} : vector<8x9xf32> to vector<8x1xf32>
    %41 = vector.broadcast %40 : vector<8x1xf32> to vector<8x256xf32>
    %42 = arith.mulf %41, %1 : vector<8x256xf32>
    %43 = arith.addf %39, %42 : vector<8x256xf32>
    %44 = vector.extract_strided_slice %2 {offsets = [0, 8], sizes = [8, 1], strides = [1, 1]} : vector<8x9xf32> to vector<8x1xf32>
    %45 = vector.broadcast %44 : vector<8x1xf32> to vector<8x256xf32>
    %46 = arith.mulf %45, %14 : vector<8x256xf32>
    %47 = arith.addf %43, %46 : vector<8x256xf32>
    %c16_i32 = arith.constant 16 : i32
    %48 = tpu.dynamic_rotate %25 by %c16_i32 dim 1 : vector<8x256xf32>, i32 -> vector<8x256xf32>
    %49 = vector.broadcast %7 : vector<1x256xf32> to vector<8x256xf32>
    %50 = arith.mulf %48, %49 : vector<8x256xf32>
    %51 = arith.addf %36, %50 : vector<8x256xf32>
    %c240_i32 = arith.constant 240 : i32
    %52 = tpu.dynamic_rotate %47 by %c240_i32 dim 1 : vector<8x256xf32>, i32 -> vector<8x256xf32>
    %53 = vector.broadcast %8 : vector<1x256xf32> to vector<8x256xf32>
    %54 = arith.mulf %52, %53 : vector<8x256xf32>
    %55 = arith.addf %51, %54 : vector<8x256xf32>
    %cst = arith.constant dense<0.000000e+00> : vector<8xf32>
    %56 = vector.multi_reduction <add>, %55, %cst [1] : vector<8x256xf32> to vector<8xf32>
    %57 = vector.shape_cast %56 : vector<8xf32> to vector<8x1xf32>
    %58 = arith.mulf %55, %55 : vector<8x256xf32>
    %cst_8 = arith.constant dense<0.000000e+00> : vector<8xf32>
    %59 = vector.multi_reduction <add>, %58, %cst_8 [1] : vector<8x256xf32> to vector<8xf32>
    %60 = vector.shape_cast %59 : vector<8xf32> to vector<8x1xf32>
    %cst_9 = arith.constant 3.906250e-03 : f32
    %61 = vector.broadcast %cst_9 : f32 to vector<8x1xf32>
    %62 = arith.mulf %57, %61 : vector<8x1xf32>
    %cst_10 = arith.constant 3.906250e-03 : f32
    %63 = vector.broadcast %cst_10 : f32 to vector<8x1xf32>
    %64 = arith.mulf %60, %63 : vector<8x1xf32>
    %65 = arith.mulf %62, %62 : vector<8x1xf32>
    %66 = arith.subf %64, %65 : vector<8x1xf32>
    %cst_11 = arith.constant 0.000000e+00 : f32
    %67 = vector.broadcast %cst_11 : f32 to vector<8x1xf32>
    %68 = arith.maximumf %66, %67 : vector<8x1xf32>
    %69 = vector.broadcast %62 : vector<8x1xf32> to vector<8x256xf32>
    %70 = arith.subf %55, %69 : vector<8x256xf32>
    %cst_12 = arith.constant 9.99999974E-6 : f32
    %71 = vector.broadcast %cst_12 : f32 to vector<8x1xf32>
    %72 = arith.addf %68, %71 : vector<8x1xf32>
    %73 = math.rsqrt %72 : vector<8x1xf32>
    %74 = vector.broadcast %73 : vector<8x1xf32> to vector<8x256xf32>
    %75 = arith.mulf %70, %74 : vector<8x256xf32>
    %cst_13 = arith.constant 0.000000e+00 : f32
    %76 = vector.broadcast %cst_13 : f32 to vector<8x256xf32>
    %77 = arith.cmpf oge, %75, %76 : vector<8x256xf32>
    %cst_14 = arith.constant 2.000000e-01 : f32
    %78 = vector.broadcast %cst_14 : f32 to vector<8x256xf32>
    %79 = arith.mulf %78, %75 : vector<8x256xf32>
    %80 = arith.select %77, %75, %79 : vector<8x256xi1>, vector<8x256xf32>
    %81 = vector.extract_strided_slice %80 {offsets = [0, 0], sizes = [4, 256], strides = [1, 1]} : vector<8x256xf32> to vector<4x256xf32>
    %82 = vector.extract_strided_slice %3 {offsets = [0, 0], sizes = [8, 1], strides = [1, 1]} : vector<8x4xf32> to vector<8x1xf32>
    %83 = vector.extract_strided_slice %81 {offsets = [0, 0], sizes = [1, 256], strides = [1, 1]} : vector<4x256xf32> to vector<1x256xf32>
    %84 = vector.broadcast %82 : vector<8x1xf32> to vector<8x256xf32>
    %85 = vector.broadcast %83 : vector<1x256xf32> to vector<8x256xf32>
    %86 = arith.mulf %84, %85 : vector<8x256xf32>
    %87 = vector.extract_strided_slice %3 {offsets = [0, 1], sizes = [8, 1], strides = [1, 1]} : vector<8x4xf32> to vector<8x1xf32>
    %88 = vector.extract_strided_slice %81 {offsets = [1, 0], sizes = [1, 256], strides = [1, 1]} : vector<4x256xf32> to vector<1x256xf32>
    %89 = vector.broadcast %87 : vector<8x1xf32> to vector<8x256xf32>
    %90 = vector.broadcast %88 : vector<1x256xf32> to vector<8x256xf32>
    %91 = arith.mulf %89, %90 : vector<8x256xf32>
    %92 = arith.addf %86, %91 : vector<8x256xf32>
    %93 = vector.extract_strided_slice %3 {offsets = [0, 2], sizes = [8, 1], strides = [1, 1]} : vector<8x4xf32> to vector<8x1xf32>
    %94 = vector.extract_strided_slice %81 {offsets = [2, 0], sizes = [1, 256], strides = [1, 1]} : vector<4x256xf32> to vector<1x256xf32>
    %95 = vector.broadcast %93 : vector<8x1xf32> to vector<8x256xf32>
    %96 = vector.broadcast %94 : vector<1x256xf32> to vector<8x256xf32>
    %97 = arith.mulf %95, %96 : vector<8x256xf32>
    %98 = arith.addf %92, %97 : vector<8x256xf32>
    %99 = vector.extract_strided_slice %3 {offsets = [0, 3], sizes = [8, 1], strides = [1, 1]} : vector<8x4xf32> to vector<8x1xf32>
    %100 = vector.extract_strided_slice %81 {offsets = [3, 0], sizes = [1, 256], strides = [1, 1]} : vector<4x256xf32> to vector<1x256xf32>
    %101 = vector.broadcast %99 : vector<8x1xf32> to vector<8x256xf32>
    %102 = vector.broadcast %100 : vector<1x256xf32> to vector<8x256xf32>
    %103 = arith.mulf %101, %102 : vector<8x256xf32>
    %104 = arith.addf %98, %103 : vector<8x256xf32>
    %cst_15 = arith.constant dense<0.000000e+00> : vector<8xf32>
    %105 = vector.multi_reduction <add>, %104, %cst_15 [1] : vector<8x256xf32> to vector<8xf32>
    %106 = vector.shape_cast %105 : vector<8xf32> to vector<8x1xf32>
    %107 = arith.mulf %104, %104 : vector<8x256xf32>
    %cst_16 = arith.constant dense<0.000000e+00> : vector<8xf32>
    %108 = vector.multi_reduction <add>, %107, %cst_16 [1] : vector<8x256xf32> to vector<8xf32>
    %109 = vector.shape_cast %108 : vector<8xf32> to vector<8x1xf32>
    %cst_17 = arith.constant 3.906250e-03 : f32
    %110 = vector.broadcast %cst_17 : f32 to vector<8x1xf32>
    %111 = arith.mulf %106, %110 : vector<8x1xf32>
    %cst_18 = arith.constant 3.906250e-03 : f32
    %112 = vector.broadcast %cst_18 : f32 to vector<8x1xf32>
    %113 = arith.mulf %109, %112 : vector<8x1xf32>
    %114 = arith.mulf %111, %111 : vector<8x1xf32>
    %115 = arith.subf %113, %114 : vector<8x1xf32>
    %cst_19 = arith.constant 0.000000e+00 : f32
    %116 = vector.broadcast %cst_19 : f32 to vector<8x1xf32>
    %117 = arith.maximumf %115, %116 : vector<8x1xf32>
    %118 = vector.broadcast %111 : vector<8x1xf32> to vector<8x256xf32>
    %119 = arith.subf %104, %118 : vector<8x256xf32>
    %cst_20 = arith.constant 9.99999974E-6 : f32
    %120 = vector.broadcast %cst_20 : f32 to vector<8x1xf32>
    %121 = arith.addf %117, %120 : vector<8x1xf32>
    %122 = math.rsqrt %121 : vector<8x1xf32>
    %123 = vector.broadcast %122 : vector<8x1xf32> to vector<8x256xf32>
    %124 = arith.mulf %119, %123 : vector<8x256xf32>
    %cst_21 = arith.constant 0.000000e+00 : f32
    %125 = vector.broadcast %cst_21 : f32 to vector<8x256xf32>
    %126 = arith.cmpf oge, %124, %125 : vector<8x256xf32>
    %cst_22 = arith.constant 2.000000e-01 : f32
    %127 = vector.broadcast %cst_22 : f32 to vector<8x256xf32>
    %128 = arith.mulf %127, %124 : vector<8x256xf32>
    %129 = arith.select %126, %124, %128 : vector<8x256xi1>, vector<8x256xf32>
    %c0_23 = arith.constant 0 : index
    %c0_24 = arith.constant 0 : index
    %c0_25 = arith.constant 0 : index
    %130 = vector.load %arg5[%c0_23, %c0_24, %c0_25] : memref<2x8x256xf32, #tpu.memory_space<vmem>>, vector<1x8x256xf32>
    %131 = vector.shape_cast %130 : vector<1x8x256xf32> to vector<8x256xf32>
    %132 = vector.shape_cast %129 : vector<8x256xf32> to vector<1x8x256xf32>
    tpu.vector_store %arg5[%c0_23, %c0_24, %c0_25], %132 {strides = array<i32>} : memref<2x8x256xf32, #tpu.memory_space<vmem>>, vector<1x8x256xf32>,
    %133 = vector.extract_strided_slice %80 {offsets = [4, 0], sizes = [4, 256], strides = [1, 1]} : vector<8x256xf32> to vector<4x256xf32>
    %134 = vector.extract_strided_slice %3 {offsets = [0, 0], sizes = [8, 1], strides = [1, 1]} : vector<8x4xf32> to vector<8x1xf32>
    %135 = vector.extract_strided_slice %133 {offsets = [0, 0], sizes = [1, 256], strides = [1, 1]} : vector<4x256xf32> to vector<1x256xf32>
    %136 = vector.broadcast %134 : vector<8x1xf32> to vector<8x256xf32>
    %137 = vector.broadcast %135 : vector<1x256xf32> to vector<8x256xf32>
    %138 = arith.mulf %136, %137 : vector<8x256xf32>
    %139 = vector.extract_strided_slice %3 {offsets = [0, 1], sizes = [8, 1], strides = [1, 1]} : vector<8x4xf32> to vector<8x1xf32>
    %140 = vector.extract_strided_slice %133 {offsets = [1, 0], sizes = [1, 256], strides = [1, 1]} : vector<4x256xf32> to vector<1x256xf32>
    %141 = vector.broadcast %139 : vector<8x1xf32> to vector<8x256xf32>
    %142 = vector.broadcast %140 : vector<1x256xf32> to vector<8x256xf32>
    %143 = arith.mulf %141, %142 : vector<8x256xf32>
    %144 = arith.addf %138, %143 : vector<8x256xf32>
    %145 = vector.extract_strided_slice %3 {offsets = [0, 2], sizes = [8, 1], strides = [1, 1]} : vector<8x4xf32> to vector<8x1xf32>
    %146 = vector.extract_strided_slice %133 {offsets = [2, 0], sizes = [1, 256], strides = [1, 1]} : vector<4x256xf32> to vector<1x256xf32>
    %147 = vector.broadcast %145 : vector<8x1xf32> to vector<8x256xf32>
    %148 = vector.broadcast %146 : vector<1x256xf32> to vector<8x256xf32>
    %149 = arith.mulf %147, %148 : vector<8x256xf32>
    %150 = arith.addf %144, %149 : vector<8x256xf32>
    %151 = vector.extract_strided_slice %3 {offsets = [0, 3], sizes = [8, 1], strides = [1, 1]} : vector<8x4xf32> to vector<8x1xf32>
    %152 = vector.extract_strided_slice %133 {offsets = [3, 0], sizes = [1, 256], strides = [1, 1]} : vector<4x256xf32> to vector<1x256xf32>
    %153 = vector.broadcast %151 : vector<8x1xf32> to vector<8x256xf32>
    %154 = vector.broadcast %152 : vector<1x256xf32> to vector<8x256xf32>
    %155 = arith.mulf %153, %154 : vector<8x256xf32>
    %156 = arith.addf %150, %155 : vector<8x256xf32>
    %cst_26 = arith.constant dense<0.000000e+00> : vector<8xf32>
    %157 = vector.multi_reduction <add>, %156, %cst_26 [1] : vector<8x256xf32> to vector<8xf32>
    %158 = vector.shape_cast %157 : vector<8xf32> to vector<8x1xf32>
    %159 = arith.mulf %156, %156 : vector<8x256xf32>
    %cst_27 = arith.constant dense<0.000000e+00> : vector<8xf32>
    %160 = vector.multi_reduction <add>, %159, %cst_27 [1] : vector<8x256xf32> to vector<8xf32>
    %161 = vector.shape_cast %160 : vector<8xf32> to vector<8x1xf32>
    %cst_28 = arith.constant 3.906250e-03 : f32
    %162 = vector.broadcast %cst_28 : f32 to vector<8x1xf32>
    %163 = arith.mulf %158, %162 : vector<8x1xf32>
    %cst_29 = arith.constant 3.906250e-03 : f32
    %164 = vector.broadcast %cst_29 : f32 to vector<8x1xf32>
    %165 = arith.mulf %161, %164 : vector<8x1xf32>
    %166 = arith.mulf %163, %163 : vector<8x1xf32>
    %167 = arith.subf %165, %166 : vector<8x1xf32>
    %cst_30 = arith.constant 0.000000e+00 : f32
    %168 = vector.broadcast %cst_30 : f32 to vector<8x1xf32>
    %169 = arith.maximumf %167, %168 : vector<8x1xf32>
    %170 = vector.broadcast %163 : vector<8x1xf32> to vector<8x256xf32>
    %171 = arith.subf %156, %170 : vector<8x256xf32>
    %cst_31 = arith.constant 9.99999974E-6 : f32
    %172 = vector.broadcast %cst_31 : f32 to vector<8x1xf32>
    %173 = arith.addf %169, %172 : vector<8x1xf32>
    %174 = math.rsqrt %173 : vector<8x1xf32>
    %175 = vector.broadcast %174 : vector<8x1xf32> to vector<8x256xf32>
    %176 = arith.mulf %171, %175 : vector<8x256xf32>
    %cst_32 = arith.constant 0.000000e+00 : f32
    %177 = vector.broadcast %cst_32 : f32 to vector<8x256xf32>
    %178 = arith.cmpf oge, %176, %177 : vector<8x256xf32>
    %cst_33 = arith.constant 2.000000e-01 : f32
    %179 = vector.broadcast %cst_33 : f32 to vector<8x256xf32>
    %180 = arith.mulf %179, %176 : vector<8x256xf32>
    %181 = arith.select %178, %176, %180 : vector<8x256xi1>, vector<8x256xf32>
    %c1 = arith.constant 1 : index
    %c0_34 = arith.constant 0 : index
    %c0_35 = arith.constant 0 : index
    %182 = vector.load %arg5[%c1, %c0_34, %c0_35] : memref<2x8x256xf32, #tpu.memory_space<vmem>>, vector<1x8x256xf32>
    %183 = vector.shape_cast %182 : vector<1x8x256xf32> to vector<8x256xf32>
    %184 = vector.shape_cast %181 : vector<8x256xf32> to vector<1x8x256xf32>
    tpu.vector_store %arg5[%c1, %c0_34, %c0_35], %184 {strides = array<i32>} : memref<2x8x256xf32, #tpu.memory_space<vmem>>, vector<1x8x256xf32>,
    return
  }
  func.func @transform_0(%arg0: i32) -> (i32, i32, i32) {
    %c0_i32 = arith.constant 0 : i32
    %c0_i32_0 = arith.constant 0 : i32
    %c0_i32_1 = arith.constant 0 : i32
    return %arg0, %c0_i32, %c0_i32_0 : i32, i32, i32
  }
  func.func @transform_1(%arg0: i32) -> (i32, i32) {
    %c0_i32 = arith.constant 0 : i32
    %c0_i32_0 = arith.constant 0 : i32
    %c0_i32_1 = arith.constant 0 : i32
    return %c0_i32, %c0_i32_0 : i32, i32
  }
  func.func @transform_2(%arg0: i32) -> (i32, i32) {
    %c0_i32 = arith.constant 0 : i32
    %c0_i32_0 = arith.constant 0 : i32
    %c0_i32_1 = arith.constant 0 : i32
    return %c0_i32, %c0_i32_0 : i32, i32
  }
  func.func @transform_3(%arg0: i32) -> (i32, i32) {
    %c0_i32 = arith.constant 0 : i32
    %c0_i32_0 = arith.constant 0 : i32
    %c0_i32_1 = arith.constant 0 : i32
    return %c0_i32, %c0_i32_0 : i32, i32
  }
  func.func @transform_4(%arg0: i32) -> (i32, i32, i32) {
    %c0_i32 = arith.constant 0 : i32
    %c0_i32_0 = arith.constant 0 : i32
    %c0_i32_1 = arith.constant 0 : i32
    return %arg0, %c0_i32, %c0_i32_0 : i32, i32, i32
  }
}

</mosaic_0001>

<llo_original>
// kernel: tpu_custom_call.1
$region0: #{tpu_custom_call.1}
  #allocation0 [shape = 'u32[]', space=smem, size = 0x4, offset = 0x4, fixed_abs, tag = 'smem constant byte address 0x4 - core index']
  #allocation1 [shape = 'u32[144,128]{1,0:T(1,128)}', space=vmem, size = 0x12000, scoped, tag = 'internal scratch']
  %s0 = inlined_call_operand.hbm [shape: f32[2,4,256], index: 0, kind: input, shape index: {}]
  %s1 = inlined_call_operand.vmem [shape: f32[8,9], index: 1, kind: input, shape index: {}]
  %s2 = inlined_call_operand.vmem [shape: f32[8,4], index: 2, kind: input, shape index: {}]
  %s3 = inlined_call_operand.vmem [shape: f32[4,256], index: 3, kind: input, shape index: {}]
  %s4 = inlined_call_operand.hbm [shape: f32[2,8,256], index: 4, kind: output, shape index: {}]
  %s5 = sld [smem:[#allocation0]]
  $region30: #{tpu_custom_call.1} parent=0
    _
  %s7 = ssub.s32 1, %s5
  %s8 = scalar_select 0, %s7, %s5
  $region1: #{tpu_custom_call.1} parent=0
    #allocation2 [shape = 'u8[8192]{0}', space=vmem, size = 0x2000, scoped, tag = 'input window, operand 0, single buffered']
    #allocation3 [shape = 's32[1]{0}', space=sflag, size = 0x4, scoped, tag = 'scoped memory for tpu_custom_call.1']
    #allocation4 [shape = 's32[1]{0}', space=sflag, size = 0x4, scoped, tag = 'scoped memory for tpu_custom_call.1']
    #allocation5 [shape = 'u8[16384]{0}', space=vmem, size = 0x4000, scoped, tag = 'output window, operand 0, single buffered']
    %9 = vsyncpa [#allocation3], 0
    %10 = vsyncpa [#allocation4], 0
    // Predicated region
    $region2: #{tpu_custom_call.1} parent=1 // pred_check
      _
    $region3: #{tpu_custom_call.1} parent=1 // pred_check_branch
      %12 = sbr.rel (0) target = $region5
    $region4: #{tpu_custom_call.1} parent=1 // pred_region
      %s14 = ssub.s32 256, 256
      %15 = vsyncadd [#allocation3], %s14
      %s16 = sshll.u32 [#allocation2], 4
      %s17 = int_to_ptr.vmem [resolvable:$true] %s16
      %22 = dma.hbm_to_vmem [thread:$0]  %s0, 256, %s17, [#allocation3], 128, 128, 8
    $region5: #{tpu_custom_call.1} parent=1 // pred_fallthru
      _
    // Predicated region
    $region6: #{tpu_custom_call.1} parent=1 // pred_check
      _
    $region7: #{tpu_custom_call.1} parent=1 // pred_check_branch
      %24 = sbr.rel (0) target = $region9
    $region8: #{tpu_custom_call.1} parent=1 // pred_region
      _
    $region9: #{tpu_custom_call.1} parent=1 // pred_fallthru
      _
    // Predicated region
    $region10: #{tpu_custom_call.1} parent=1 // pred_check
      _
    $region11: #{tpu_custom_call.1} parent=1 // pred_check_branch
      %26 = sbr.rel (0) target = $region13
    $region12: #{tpu_custom_call.1} parent=1 // pred_region
      _
    $region13: #{tpu_custom_call.1} parent=1 // pred_fallthru
      _
    // Predicated region
    $region14: #{tpu_custom_call.1} parent=1 // pred_check
      _
    $region15: #{tpu_custom_call.1} parent=1 // pred_check_branch
      %28 = sbr.rel (0) target = $region17
    $region16: #{tpu_custom_call.1} parent=1 // pred_region
      _
    $region17: #{tpu_custom_call.1} parent=1 // pred_fallthru
      _
    // Predicated region
    $region18: #{tpu_custom_call.1} parent=1 // pred_check
      _
    $region19: #{tpu_custom_call.1} parent=1 // pred_check_branch
      %30 = sbr.rel (0) target = $region21
    $region20: #{tpu_custom_call.1} parent=1 // pred_region
      %31 = dma.done [#allocation3], 256
    $region21: #{tpu_custom_call.1} parent=1 // pred_fallthru
      _
    %v32 = vld [vmem:[#allocation2] sm:$0xff]
    %v33 = vld [vmem:[#allocation2 + $0x8] sm:$0xff]
    %v34 = vld [vmem:[%s1] sm:$0xff]
    %v35 = vld [vmem:[%s2] sm:$0xff]
    %v36 = vld [vmem:[%s3] sm:$0xff]
    %v39 = vcombine.low %v32, %v33
    %v40 = vcombine.high %v32, %v33
    %43 = vrot.lane.b32.xlu0 %v39, 1
    %v44 = vpop.permute.xlu0 %43
    %45 = vrot.lane.b32.xlu0 %v40, 1
    %v46 = vpop.permute.xlu0 %45
    %v47 = vlaneseq
    %v48 = vand.u32 %v47, 127
    %vm49 = vcmp.lt.s32.totalorder %v48, 1
    %v50 = vsel %vm49, %v44, %v46
    %v51 = vsel %vm49, %v46, %v44
    %v53 = vlaneseq
    %v54 = vshrl.u32 %v53, 7
    %v55 = vsub.s32 0, %v54
    %v56 = vrot.slane %v36, %v55
    %v57 = vlaneseq
    %v58 = vshrl.u32 %v57, 7
    %v59 = vsub.s32 4, %v58
    %v60 = vrot.slane %v36, %v59
    %v63 = vlaneseq
    %v64 = vshrl.u32 %v63, 7
    %v65 = vsub.s32 0, %v64
    %v66 = vrot.slane %v56, %v65
    %v67 = vlaneseq
    %v68 = vshrl.u32 %v67, 7
    %v69 = vsub.s32 0, %v68
    %v70 = vrot.slane %v60, %v69
    %v71 = vmul.f32 %v51, %v66
    %v72 = vmul.f32 %v50, %v70
    %73 = vrot.lane.b32.xlu0 %v39, 127
    %v74 = vpop.permute.xlu0 %73
    %75 = vrot.lane.b32.xlu0 %v40, 127
    %v76 = vpop.permute.xlu0 %75
    %vm77 = vcmp.lt.s32.totalorder %v48, 127
    %v78 = vsel %vm77, %v74, %v76
    %v79 = vsel %vm77, %v76, %v74
    %v80 = vlaneseq
    %v81 = vshrl.u32 %v80, 7
    %v82 = vsub.s32 1, %v81
    %v83 = vrot.slane %v36, %v82
    %v84 = vlaneseq
    %v85 = vshrl.u32 %v84, 7
    %v86 = vsub.s32 5, %v85
    %v87 = vrot.slane %v36, %v86
    %v90 = vlaneseq
    %v91 = vshrl.u32 %v90, 7
    %v92 = vsub.s32 1, %v91
    %v93 = vrot.slane %v83, %v92
    %v94 = vlaneseq
    %v95 = vshrl.u32 %v94, 7
    %v96 = vsub.s32 1, %v95
    %v97 = vrot.slane %v87, %v96
    %v98 = vmul.f32 %v78, %v93
    %v99 = vmul.f32 %v79, %v97
    %101 = vset.pattern.permute.xlu0 0
    %102 = vperm.xlu0 %101, %v34
    %v103 = vpop.permute.xlu0 %102
    %v105 = vmul.f32 %v103, %v71
    %v106 = vmul.f32 %v103, %v72
    %107 = vset.pattern.permute.xlu0 1
    %108 = vperm.xlu0 %107, %v34
    %v109 = vpop.permute.xlu0 %108
    %v111 = vmul.f32 %v109, %v39
    %v112 = vmul.f32 %v109, %v40
    %v113 = vadd.f32 %v105, %v111
    %v114 = vadd.f32 %v106, %v112
    %115 = vset.pattern.permute.xlu0 2
    %116 = vperm.xlu0 %115, %v34
    %v117 = vpop.permute.xlu0 %116
    %v119 = vmul.f32 %v117, %v98
    %v120 = vmul.f32 %v117, %v99
    %v121 = vadd.f32 %v113, %v119
    %v122 = vadd.f32 %v114, %v120
    %123 = vset.pattern.permute.xlu0 3
    %124 = vperm.xlu0 %123, %v34
    %v125 = vpop.permute.xlu0 %124
    %v127 = vmul.f32 %v125, %v71
    %v128 = vmul.f32 %v125, %v72
    %129 = vset.pattern.permute.xlu0 4
    %130 = vperm.xlu0 %129, %v34
    %v131 = vpop.permute.xlu0 %130
    %v133 = vmul.f32 %v131, %v39
    %v134 = vmul.f32 %v131, %v40
    %v135 = vadd.f32 %v127, %v133
    %v136 = vadd.f32 %v128, %v134
    %137 = vset.pattern.permute.xlu0 5
    %138 = vperm.xlu0 %137, %v34
    %v139 = vpop.permute.xlu0 %138
    %v141 = vmul.f32 %v139, %v98
    %v142 = vmul.f32 %v139, %v99
    %v143 = vadd.f32 %v135, %v141
    %v144 = vadd.f32 %v136, %v142
    %145 = vset.pattern.permute.xlu0 6
    %146 = vperm.xlu0 %145, %v34
    %v147 = vpop.permute.xlu0 %146
    %v149 = vmul.f32 %v147, %v71
    %v150 = vmul.f32 %v147, %v72
    %151 = vset.pattern.permute.xlu0 7
    %152 = vperm.xlu0 %151, %v34
    %v153 = vpop.permute.xlu0 %152
    %v155 = vmul.f32 %v153, %v39
    %v156 = vmul.f32 %v153, %v40
    %v157 = vadd.f32 %v149, %v155
    %v158 = vadd.f32 %v150, %v156
    %159 = vset.pattern.permute.xlu0 8
    %160 = vperm.xlu0 %159, %v34
    %v161 = vpop.permute.xlu0 %160
    %v163 = vmul.f32 %v161, %v98
    %v164 = vmul.f32 %v161, %v99
    %v165 = vadd.f32 %v157, %v163
    %v166 = vadd.f32 %v158, %v164
    %167 = vrot.lane.b32.xlu0 %v121, 16
    %v168 = vpop.permute.xlu0 %167
    %169 = vrot.lane.b32.xlu0 %v122, 16
    %v170 = vpop.permute.xlu0 %169
    %vm171 = vcmp.lt.s32.totalorder %v48, 16
    %v172 = vsel %vm171, %v168, %v170
    %v173 = vsel %vm171, %v170, %v168
    %v174 = vlaneseq
    %v175 = vshrl.u32 %v174, 7
    %v176 = vsub.s32 2, %v175
    %v177 = vrot.slane %v36, %v176
    %v178 = vlaneseq
    %v179 = vshrl.u32 %v178, 7
    %v180 = vsub.s32 6, %v179
    %v181 = vrot.slane %v36, %v180
    %v184 = vlaneseq
    %v185 = vshrl.u32 %v184, 7
    %v186 = vsub.s32 2, %v185
    %v187 = vrot.slane %v177, %v186
    %v188 = vlaneseq
    %v189 = vshrl.u32 %v188, 7
    %v190 = vsub.s32 2, %v189
    %v191 = vrot.slane %v181, %v190
    %v192 = vmul.f32 %v173, %v187
    %v193 = vmul.f32 %v172, %v191
    %v194 = vadd.f32 %v143, %v192
    %v195 = vadd.f32 %v144, %v193
    %196 = vrot.lane.b32.xlu0 %v165, 112
    %v197 = vpop.permute.xlu0 %196
    %198 = vrot.lane.b32.xlu0 %v166, 112
    %v199 = vpop.permute.xlu0 %198
    %vm200 = vcmp.lt.s32.totalorder %v48, 112
    %v201 = vsel %vm200, %v197, %v199
    %v202 = vsel %vm200, %v199, %v197
    %v203 = vlaneseq
    %v204 = vshrl.u32 %v203, 7
    %v205 = vsub.s32 3, %v204
    %v206 = vrot.slane %v36, %v205
    %v207 = vlaneseq
    %v208 = vshrl.u32 %v207, 7
    %v209 = vsub.s32 7, %v208
    %v210 = vrot.slane %v36, %v209
    %v213 = vlaneseq
    %v214 = vshrl.u32 %v213, 7
    %v215 = vsub.s32 3, %v214
    %v216 = vrot.slane %v206, %v215
    %v217 = vlaneseq
    %v218 = vshrl.u32 %v217, 7
    %v219 = vsub.s32 3, %v218
    %v220 = vrot.slane %v210, %v219
    %v221 = vmul.f32 %v201, %v216
    %v222 = vmul.f32 %v202, %v220
    %v223 = vadd.f32 %v194, %v221
    %v224 = vadd.f32 %v195, %v222
    %v225 = vadd.f32 %v223, %v224
    %226 = vadd.xlane.f32.xlu0 %v225
    %v227 = vpop.xlane.xlu0 %226
    %v228 = vmul.f32 %v223, %v223
    %v229 = vmul.f32 %v224, %v224
    %v230 = vadd.f32 %v228, %v229
    %231 = vadd.xlane.f32.xlu0 %v230
    %v232 = vpop.xlane.xlu0 %231
    %v233 = vmul.f32 %v227, 0.00390625
    %v234 = vmul.f32 %v232, 0.00390625
    %v235 = vmul.f32 %v233, %v233
    %v236 = vsub.f32 %v234, %v235
    %v237 = vmax.f32 %v236, 0.0
    %v238 = vsub.f32 %v223, %v233
    %v239 = vsub.f32 %v224, %v233
    %v240 = vadd.f32 %v237, 1e-05
    %v241 = vrsqrt.pop %v240
    %v242 = vmul.f32 %v238, %v241
    %v243 = vmul.f32 %v239, %v241
    %vm244 = vcmp.ge.f32.partialorder %v242, 0.0
    %vm245 = vcmp.ge.f32.partialorder %v243, 0.0
    %v246 = vmul.f32 %v242, 0.2
    %v247 = vmul.f32 %v243, 0.2
    %v248 = vsel %vm244, %v242, %v246
    %v249 = vsel %vm245, %v243, %v247
    %251 = vset.pattern.permute.xlu0 0
    %252 = vperm.xlu0 %251, %v35
    %v253 = vpop.permute.xlu0 %252
    %v255 = vlaneseq
    %v256 = vshrl.u32 %v255, 7
    %v257 = vsub.s32 0, %v256
    %v258 = vrot.slane %v248, %v257
    %v259 = vlaneseq
    %v260 = vshrl.u32 %v259, 7
    %v261 = vsub.s32 0, %v260
    %v262 = vrot.slane %v249, %v261
    %v263 = vmul.f32 %v253, %v258
    %v264 = vmul.f32 %v253, %v262
    %265 = vset.pattern.permute.xlu0 1
    %266 = vperm.xlu0 %265, %v35
    %v267 = vpop.permute.xlu0 %266
    %v269 = vlaneseq
    %v270 = vshrl.u32 %v269, 7
    %v271 = vsub.s32 1, %v270
    %v272 = vrot.slane %v248, %v271
    %v273 = vlaneseq
    %v274 = vshrl.u32 %v273, 7
    %v275 = vsub.s32 1, %v274
    %v276 = vrot.slane %v249, %v275
    %v277 = vmul.f32 %v267, %v272
    %v278 = vmul.f32 %v267, %v276
    %v279 = vadd.f32 %v263, %v277
    %v280 = vadd.f32 %v264, %v278
    %281 = vset.pattern.permute.xlu0 2
    %282 = vperm.xlu0 %281, %v35
    %v283 = vpop.permute.xlu0 %282
    %v285 = vlaneseq
    %v286 = vshrl.u32 %v285, 7
    %v287 = vsub.s32 2, %v286
    %v288 = vrot.slane %v248, %v287
    %v289 = vlaneseq
    %v290 = vshrl.u32 %v289, 7
    %v291 = vsub.s32 2, %v290
    %v292 = vrot.slane %v249, %v291
    %v293 = vmul.f32 %v283, %v288
    %v294 = vmul.f32 %v283, %v292
    %v295 = vadd.f32 %v279, %v293
    %v296 = vadd.f32 %v280, %v294
    %297 = vset.pattern.permute.xlu0 3
    %298 = vperm.xlu0 %297, %v35
    %v299 = vpop.permute.xlu0 %298
    %v301 = vlaneseq
    %v302 = vshrl.u32 %v301, 7
    %v303 = vsub.s32 3, %v302
    %v304 = vrot.slane %v248, %v303
    %v305 = vlaneseq
    %v306 = vshrl.u32 %v305, 7
    %v307 = vsub.s32 3, %v306
    %v308 = vrot.slane %v249, %v307
    %v309 = vmul.f32 %v299, %v304
    %v310 = vmul.f32 %v299, %v308
    %v311 = vadd.f32 %v295, %v309
    %v312 = vadd.f32 %v296, %v310
    %v313 = vadd.f32 %v311, %v312
    %314 = vadd.xlane.f32.xlu0 %v313
    %v315 = vpop.xlane.xlu0 %314
    %v316 = vmul.f32 %v311, %v311
    %v317 = vmul.f32 %v312, %v312
    %v318 = vadd.f32 %v316, %v317
    %319 = vadd.xlane.f32.xlu0 %v318
    %v320 = vpop.xlane.xlu0 %319
    %v321 = vmul.f32 %v315, 0.00390625
    %v322 = vmul.f32 %v320, 0.00390625
    %v323 = vmul.f32 %v321, %v321
    %v324 = vsub.f32 %v322, %v323
    %v325 = vmax.f32 %v324, 0.0
    %v326 = vsub.f32 %v311, %v321
    %v327 = vsub.f32 %v312, %v321
    %v328 = vadd.f32 %v325, 1e-05
    %v329 = vrsqrt.pop %v328
    %v330 = vmul.f32 %v326, %v329
    %v331 = vmul.f32 %v327, %v329
    %vm332 = vcmp.ge.f32.partialorder %v330, 0.0
    %vm333 = vcmp.ge.f32.partialorder %v331, 0.0
    %v334 = vmul.f32 %v330, 0.2
    %v335 = vmul.f32 %v331, 0.2
    %v336 = vsel %vm332, %v330, %v334
    %v337 = vsel %vm333, %v331, %v335
    %338 = vst [vmem:[#allocation5] sm:$0xff] %v336
    %339 = vst [vmem:[#allocation5 + $0x8] sm:$0xff] %v337
    %v340 = vlaneseq
    %v341 = vshrl.u32 %v340, 7
    %v342 = vsub.s32 4, %v341
    %v343 = vrot.slane %v248, %v342
    %v344 = vlaneseq
    %v345 = vshrl.u32 %v344, 7
    %v346 = vsub.s32 4, %v345
    %v347 = vrot.slane %v249, %v346
    %v348 = vmul.f32 %v253, %v343
    %v349 = vmul.f32 %v253, %v347
    %v350 = vlaneseq
    %v351 = vshrl.u32 %v350, 7
    %v352 = vsub.s32 5, %v351
    %v353 = vrot.slane %v248, %v352
    %v354 = vlaneseq
    %v355 = vshrl.u32 %v354, 7
    %v356 = vsub.s32 5, %v355
    %v357 = vrot.slane %v249, %v356
    %v358 = vmul.f32 %v267, %v353
    %v359 = vmul.f32 %v267, %v357
    %v360 = vadd.f32 %v348, %v358
    %v361 = vadd.f32 %v349, %v359
    %v362 = vlaneseq
    %v363 = vshrl.u32 %v362, 7
    %v364 = vsub.s32 6, %v363
    %v365 = vrot.slane %v248, %v364
    %v366 = vlaneseq
    %v367 = vshrl.u32 %v366, 7
    %v368 = vsub.s32 6, %v367
    %v369 = vrot.slane %v249, %v368
    %v370 = vmul.f32 %v283, %v365
    %v371 = vmul.f32 %v283, %v369
    %v372 = vadd.f32 %v360, %v370
    %v373 = vadd.f32 %v361, %v371
    %v374 = vlaneseq
    %v375 = vshrl.u32 %v374, 7
    %v376 = vsub.s32 7, %v375
    %v377 = vrot.slane %v248, %v376
    %v378 = vlaneseq
    %v379 = vshrl.u32 %v378, 7
    %v380 = vsub.s32 7, %v379
    %v381 = vrot.slane %v249, %v380
    %v382 = vmul.f32 %v299, %v377
    %v383 = vmul.f32 %v299, %v381
    %v384 = vadd.f32 %v372, %v382
    %v385 = vadd.f32 %v373, %v383
    %v386 = vadd.f32 %v384, %v385
    %387 = vadd.xlane.f32.xlu0 %v386
    %v388 = vpop.xlane.xlu0 %387
    %v389 = vmul.f32 %v384, %v384
    %v390 = vmul.f32 %v385, %v385
    %v391 = vadd.f32 %v389, %v390
    %392 = vadd.xlane.f32.xlu0 %v391
    %v393 = vpop.xlane.xlu0 %392
    %v394 = vmul.f32 %v388, 0.00390625
    %v395 = vmul.f32 %v393, 0.00390625
    %v396 = vmul.f32 %v394, %v394
    %v397 = vsub.f32 %v395, %v396
    %v398 = vmax.f32 %v397, 0.0
    %v399 = vsub.f32 %v384, %v394
    %v400 = vsub.f32 %v385, %v394
    %v401 = vadd.f32 %v398, 1e-05
    %v402 = vrsqrt.pop %v401
    %v403 = vmul.f32 %v399, %v402
    %v404 = vmul.f32 %v400, %v402
    %vm405 = vcmp.ge.f32.partialorder %v403, 0.0
    %vm406 = vcmp.ge.f32.partialorder %v404, 0.0
    %v407 = vmul.f32 %v403, 0.2
    %v408 = vmul.f32 %v404, 0.2
    %v409 = vsel %vm405, %v403, %v407
    %v410 = vsel %vm406, %v404, %v408
    %s411 = scalar_lea.vmem [#allocation5], 16
    %412 = vst [vmem:[%s411] sm:$0xff] %v409
    %413 = vst [vmem:[%s411 + $0x8] sm:$0xff] %v410
    // Predicated region
    $region22: #{tpu_custom_call.1} parent=1 // pred_check
      _
    $region23: #{tpu_custom_call.1} parent=1 // pred_check_branch
      %415 = sbr.rel (0) target = $region25
    $region24: #{tpu_custom_call.1} parent=1 // pred_region
      %s417 = ssub.s32 512, 512
      %418 = vsyncadd [#allocation4], %s417
      %s419 = sshll.u32 [#allocation5], 4
      %s420 = int_to_ptr.vmem [resolvable:$true] %s419
      %425 = dma.vmem_to_hbm [thread:$0]  %s420, 512, %s4, [#allocation4], 256, 256, 16
    $region25: #{tpu_custom_call.1} parent=1 // pred_fallthru
      _
    // Predicated region
    $region26: #{tpu_custom_call.1} parent=1 // pred_check
      _
    $region27: #{tpu_custom_call.1} parent=1 // pred_check_branch
      %427 = sbr.rel (0) target = $region29
    $region28: #{tpu_custom_call.1} parent=1 // pred_region
      %428 = dma.done [#allocation4], 512
    $region29: #{tpu_custom_call.1} parent=1 // pred_fallthru
      _
    %429 = vsyncpa [#allocation3], 1
    %430 = vsyncpa [#allocation4], 1

</llo_original>
